<compile_context>
chip_gen: v7x
topology: tpu7x:2x2x1
jax: 0.10.0
libtpu: 0.0.40
codegen_flags: <defaults>
</compile_context>

<pallas_src>
import jax
import jax.numpy as jnp
from jax import lax
from jax.experimental import pallas as pl
from jax.experimental.pallas import tpu as pltpu

CRITERIA_NR = 5
H1, H2, H3, OUT = 40, 40, 20, 1


def _mlp_kernel(x_ref, w12_ref, b12_ref, w3_ref, b3_ref, w4_ref, b4_ref, o_ref):
    # x tile: (TB, 5) -- natural (batch, features) layout straight from HBM.
    x = x_ref[...]

    # Fused fc1+fc2 (exact: the module has no activation after fc1).
    # Contract x's feature dim (dim 1 of both operands): the batch->lanes
    # relayout is done by Mosaic on the XLU and activations come out
    # lane-dense (batch on the 128-lane axis): (40, TB).
    h = lax.dot_general(w12_ref[...], x, (((1,), (1,)), ((), ())),
                        preferred_element_type=jnp.float32) + b12_ref[...]
    h = jnp.maximum(h, 0.0)                                             # relu(fc2)
    # relu(fc3): (20, TB)
    h = jnp.dot(w3_ref[...], h, preferred_element_type=jnp.float32) + b3_ref[...]
    h = jnp.maximum(h, 0.0)
    # fc4 (+ scalar bias from SMEM): (1, TB)
    h = jnp.dot(w4_ref[...], h, preferred_element_type=jnp.float32) + b4_ref[0, 0]
    # Exact sigmoid: exp on the EUP + exact divide (kernel is DMA-bound, so
    # the approximate reciprocal bought nothing and cost accuracy).
    o_ref[...] = (1.0 / (1.0 + jnp.exp(-h))).astype(o_ref.dtype)


def _round_up(n, m):
    return ((n + m - 1) // m) * m


def simple_nn_forward(x, params, *, tb=8192):
    """x: (B, CRITERIA_NR) float32. params: PyTorch-layout (out, in) weights."""
    B = x.shape[0]
    # Tile selection:
    #  * multiple of 128 so the (1, TB) output tile is lane-dense,
    #  * no larger than needed for >= 2 grid steps (v7x: 2 TCs to shard across),
    #  * capped at `tb` (default 8192): (TB, 5) f32 input buffers are padded to
    #    128 lanes in VMEM (~TB*512 B each), so double-buffered that's ~8 MiB at
    #    TB=8192 -- well inside the 32 MiB VMEM limit requested below.
    tb = max(128, min(tb, _round_up(pl.cdiv(B, 2), 128)))
    grid = (pl.cdiv(B, tb),)   # partial last tile: OOB reads only feed OOB (masked) outputs

    w1, b1 = params["w1"], params["b1"]
    w2, b2 = params["w2"], params["b2"]
    w3, b3 = params["w3"], params["b3"]
    w4, b4 = params["w4"], params["b4"]

    # Exact host-side folding of fc1 into fc2 (no activation between them).
    w12 = w2 @ w1                # (40, 5)
    b12 = w2 @ b1 + b2           # (40, 1)

    # Constant index map => block stays VMEM-resident across all grid steps.
    resident = lambda a: pl.BlockSpec(a.shape, lambda i: (0, 0))

    flops = 2 * B * (CRITERIA_NR * H2 + H2 * H3 + H3 * OUT)
    weight_bytes = 4 * (CRITERIA_NR * H2 + H2 * H3 + H3 * OUT + H2 + H3 + OUT)
    bytes_accessed = B * (CRITERIA_NR + OUT) * 4 + weight_bytes

    out_t = pl.pallas_call(
        _mlp_kernel,
        grid=grid,
        out_shape=jax.ShapeDtypeStruct((OUT, B), jnp.float32),
        in_specs=[
            pl.BlockSpec((tb, CRITERIA_NR), lambda i: (i, 0)),    # x tile: batch rows
            resident(w12), resident(b12),
            resident(w3), resident(b3),
            resident(w4),
            pl.BlockSpec(memory_space=pltpu.MemorySpace.SMEM),    # b4 scalar
        ],
        out_specs=pl.BlockSpec((OUT, tb), lambda i: (0, i)),       # lane-dense output
        compiler_params=pltpu.CompilerParams(
            dimension_semantics=("parallel",),                     # v7x 2-TC sharding
            vmem_limit_bytes=32 * 1024 * 1024,
        ),
        cost_estimate=pl.CostEstimate(
            flops=flops, transcendentals=B, bytes_accessed=bytes_accessed),
    )(x, w12, b12, w3, b3, w4, b4)

    # (1, B) -> (B, 1) is layout-preserving in row-major order: a free reshape,
    # NOT a transpose pass over HBM.
    return out_t.reshape(B, OUT)


def init_params(key):
    """PyTorch nn.Linear default init (uniform +/- 1/sqrt(fan_in)).
    Weights stored PyTorch-style (out_features, in_features); biases (out, 1)."""
    dims = [(CRITERIA_NR, H1), (H1, H2), (H2, H3), (H3, OUT)]
    params = {}
    for i, (fan_in, fan_out) in enumerate(dims, start=1):
        key, kw, kb = jax.random.split(key, 3)
        bound = 1.0 / (fan_in ** 0.5)
        params[f"w{i}"] = jax.random.uniform(
            kw, (fan_out, fan_in), jnp.float32, minval=-bound, maxval=bound)
        params[f"b{i}"] = jax.random.uniform(
            kb, (fan_out, 1), jnp.float32, minval=-bound, maxval=bound)
    return params


def reference_forward(x, p):
    h = x @ p["w1"].T + p["b1"].T                 # fc1, no activation
    h = jax.nn.relu(h @ p["w2"].T + p["b2"].T)    # relu(fc2)
    h = jax.nn.relu(h @ p["w3"].T + p["b3"].T)    # relu(fc3)
    h = h @ p["w4"].T + p["b4"].T                 # fc4
    return jax.nn.sigmoid(h)


if __name__ == "__main__":
    key = jax.random.PRNGKey(0)
    key, kx = jax.random.split(key)

    # Small deterministic example: B=300 exercises a 2-step grid (tb clamps to
    # 256) including a partial (masked) last tile.
    B = 300
    x = jax.random.normal(kx, (B, CRITERIA_NR), dtype=jnp.float32)
    params = init_params(key)

    y = simple_nn_forward(x, params)
    y = jax.block_until_ready(y)

    y_ref = reference_forward(x, params)
    assert y.shape == (B, OUT)
    # Tolerance covers the (exact-algebra) fc1->fc2 folding's f32 rounding and
    # the explicit 1/(1+exp(-x)) sigmoid form.
    assert jnp.allclose(y, y_ref, atol=1e-4, rtol=1e-4), "mismatch vs reference"

    print("KERNEL_OK")
</pallas_src>

<mosaic_0001>
module attributes {stable_mosaic.version = 11 : i64} {
  func.func @_mlp_kernel(%arg0: i32, %arg1: memref<256x5xf32, #tpu.memory_space<vmem>>, %arg2: memref<40x5xf32, #tpu.memory_space<vmem>>, %arg3: memref<40x1xf32, #tpu.memory_space<vmem>>, %arg4: memref<20x40xf32, #tpu.memory_space<vmem>>, %arg5: memref<20x1xf32, #tpu.memory_space<vmem>>, %arg6: memref<1x20xf32, #tpu.memory_space<vmem>>, %arg7: memref<1x1xf32, #tpu.memory_space<smem>>, %arg8: memref<1x256xf32, #tpu.memory_space<vmem>>) attributes {dimension_semantics = [#tpu.dimension_semantics<parallel>], iteration_bounds = array<i64: 2>, scalar_prefetch = 0 : i64, scratch_operands = 0 : i64, tpu.core_type = #tpu.core_type<tc>, window_params = [{transform_indices = @transform_0, window_bounds = array<i64: 256, 5>}, {pipeline_mode = #tpu.pipeline_mode<synchronous>, transform_indices = @transform_1, window_bounds = array<i64: 40, 5>}, {pipeline_mode = #tpu.pipeline_mode<synchronous>, transform_indices = @transform_2, window_bounds = array<i64: 40, 1>}, {pipeline_mode = #tpu.pipeline_mode<synchronous>, transform_indices = @transform_3, window_bounds = array<i64: 20, 40>}, {pipeline_mode = #tpu.pipeline_mode<synchronous>, transform_indices = @transform_4, window_bounds = array<i64: 20, 1>}, {pipeline_mode = #tpu.pipeline_mode<synchronous>, transform_indices = @transform_5, window_bounds = array<i64: 1, 20>}, {transform_indices = @transform_6, window_bounds = array<i64: 1, 1>}, {transform_indices = @transform_7, window_bounds = array<i64: 1, 256>}]} {
    %c0 = arith.constant 0 : index
    %c0_0 = arith.constant 0 : index
    %0 = vector.load %arg1[%c0, %c0_0] : memref<256x5xf32, #tpu.memory_space<vmem>>, vector<256x5xf32>
    %c0_1 = arith.constant 0 : index
    %c0_2 = arith.constant 0 : index
    %1 = vector.load %arg2[%c0_1, %c0_2] : memref<40x5xf32, #tpu.memory_space<vmem>>, vector<40x5xf32>
    %cst = arith.constant dense<0.000000e+00> : vector<40x256xf32>
    %2 = tpu.matmul %1, %0, %cst {dimension_numbers = #tpu.dot_dimension_numbers<[1], [1], [0], [0], [0, 0, 1, 0], [], []>} : vector<40x5xf32>, vector<256x5xf32>, vector<40x256xf32> -> vector<40x256xf32>
    %c0_3 = arith.constant 0 : index
    %c0_4 = arith.constant 0 : index
    %3 = vector.load %arg3[%c0_3, %c0_4] : memref<40x1xf32, #tpu.memory_space<vmem>>, vector<40x1xf32>
    %4 = vector.broadcast %3 : vector<40x1xf32> to vector<40x256xf32>
    %5 = arith.addf %2, %4 : vector<40x256xf32>
    %cst_5 = arith.constant 0.000000e+00 : f32
    %6 = vector.broadcast %cst_5 : f32 to vector<40x256xf32>
    %7 = arith.maximumf %5, %6 : vector<40x256xf32>
    %c0_6 = arith.constant 0 : index
    %c0_7 = arith.constant 0 : index
    %8 = vector.load %arg4[%c0_6, %c0_7] : memref<20x40xf32, #tpu.memory_space<vmem>>, vector<20x40xf32>
    %cst_8 = arith.constant dense<0.000000e+00> : vector<20x256xf32>
    %9 = tpu.matmul %8, %7, %cst_8 {dimension_numbers = #tpu.dot_dimension_numbers<[1], [0], [0], [1], [0, 0, 1, 1], [], []>} : vector<20x40xf32>, vector<40x256xf32>, vector<20x256xf32> -> vector<20x256xf32>
    %c0_9 = arith.constant 0 : index
    %c0_10 = arith.constant 0 : index
    %10 = vector.load %arg5[%c0_9, %c0_10] : memref<20x1xf32, #tpu.memory_space<vmem>>, vector<20x1xf32>
    %11 = vector.broadcast %10 : vector<20x1xf32> to vector<20x256xf32>
    %12 = arith.addf %9, %11 : vector<20x256xf32>
    %cst_11 = arith.constant 0.000000e+00 : f32
    %13 = vector.broadcast %cst_11 : f32 to vector<20x256xf32>
    %14 = arith.maximumf %12, %13 : vector<20x256xf32>
    %c0_12 = arith.constant 0 : index
    %c0_13 = arith.constant 0 : index
    %15 = vector.load %arg6[%c0_12, %c0_13] : memref<1x20xf32, #tpu.memory_space<vmem>>, vector<1x20xf32>
    %cst_14 = arith.constant dense<0.000000e+00> : vector<1x256xf32>
    %16 = tpu.matmul %15, %14, %cst_14 {dimension_numbers = #tpu.dot_dimension_numbers<[1], [0], [0], [1], [0, 0, 1, 1], [], []>} : vector<1x20xf32>, vector<20x256xf32>, vector<1x256xf32> -> vector<1x256xf32>
    %c0_15 = arith.constant 0 : index
    %c0_16 = arith.constant 0 : index
    %17 = memref.load %arg7[%c0_15, %c0_16] : memref<1x1xf32, #tpu.memory_space<smem>>
    %18 = vector.broadcast %17 : f32 to vector<1x256xf32>
    %19 = arith.addf %16, %18 : vector<1x256xf32>
    %cst_17 = arith.constant 0.000000e+00 : f32
    %20 = vector.broadcast %cst_17 : f32 to vector<1x256xf32>
    %21 = arith.subf %20, %19 : vector<1x256xf32>
    %22 = math.exp %21 : vector<1x256xf32>
    %cst_18 = arith.constant 1.000000e+00 : f32
    %23 = vector.broadcast %cst_18 : f32 to vector<1x256xf32>
    %24 = arith.addf %23, %22 : vector<1x256xf32>
    %cst_19 = arith.constant 1.000000e+00 : f32
    %25 = vector.broadcast %cst_19 : f32 to vector<1x256xf32>
    %26 = arith.divf %25, %24 : vector<1x256xf32>
    %c0_20 = arith.constant 0 : index
    %c0_21 = arith.constant 0 : index
    %27 = vector.load %arg8[%c0_20, %c0_21] : memref<1x256xf32, #tpu.memory_space<vmem>>, vector<1x256xf32>
    tpu.vector_store %arg8[%c0_20, %c0_21], %26 {strides = array<i32>} : memref<1x256xf32, #tpu.memory_space<vmem>>, vector<1x256xf32>,
    return
  }
  func.func @transform_0(%arg0: i32) -> (i32, i32) {
    %c0_i32 = arith.constant 0 : i32
    %c0_i32_0 = arith.constant 0 : i32
    return %arg0, %c0_i32 : i32, i32
  }
  func.func @transform_1(%arg0: i32) -> (i32, i32) {
    %c0_i32 = arith.constant 0 : i32
    %c0_i32_0 = arith.constant 0 : i32
    %c0_i32_1 = arith.constant 0 : i32
    return %c0_i32, %c0_i32_0 : i32, i32
  }
  func.func @transform_2(%arg0: i32) -> (i32, i32) {
    %c0_i32 = arith.constant 0 : i32
    %c0_i32_0 = arith.constant 0 : i32
    %c0_i32_1 = arith.constant 0 : i32
    return %c0_i32, %c0_i32_0 : i32, i32
  }
  func.func @transform_3(%arg0: i32) -> (i32, i32) {
    %c0_i32 = arith.constant 0 : i32
    %c0_i32_0 = arith.constant 0 : i32
    %c0_i32_1 = arith.constant 0 : i32
    return %c0_i32, %c0_i32_0 : i32, i32
  }
  func.func @transform_4(%arg0: i32) -> (i32, i32) {
    %c0_i32 = arith.constant 0 : i32
    %c0_i32_0 = arith.constant 0 : i32
    %c0_i32_1 = arith.constant 0 : i32
    return %c0_i32, %c0_i32_0 : i32, i32
  }
  func.func @transform_5(%arg0: i32) -> (i32, i32) {
    %c0_i32 = arith.constant 0 : i32
    %c0_i32_0 = arith.constant 0 : i32
    %c0_i32_1 = arith.constant 0 : i32
    return %c0_i32, %c0_i32_0 : i32, i32
  }
  func.func @transform_6(%arg0: i32) -> (i32, i32) {
    %c0_i32 = arith.constant 0 : i32
    %c0_i32_0 = arith.constant 0 : i32
    %c0_i32_1 = arith.constant 0 : i32
    return %c0_i32, %c0_i32_0 : i32, i32
  }
  func.func @transform_7(%arg0: i32) -> (i32, i32) {
    %c0_i32 = arith.constant 0 : i32
    %c0_i32_0 = arith.constant 0 : i32
    return %c0_i32, %arg0 : i32, i32
  }
}

</mosaic_0001>

<llo_original>
// kernel: tpu_custom_call.1
$region0: #{tpu_custom_call.1}
  #allocation0 [shape = 'u32[]', space=smem, size = 0x4, offset = 0x4, fixed_abs, tag = 'smem constant byte address 0x4 - core index']
  #allocation1 [shape = 'u32[144,128]{1,0:T(1,128)}', space=vmem, size = 0x12000, scoped, tag = 'internal scratch']
  #allocation2 [shape = 'f32[1,1]{1,0:T(1,128)S(6)}', space=smem, size = 0x200, scoped, tag = 'scoped memory for tpu_custom_call.1']
  %s0 = inlined_call_operand.vmem [shape: f32[300,5], index: 0, kind: input, shape index: {}]
  %s1 = inlined_call_operand.vmem [shape: f32[40,5], index: 1, kind: input, shape index: {}]
  %s2 = inlined_call_operand.vmem [shape: f32[40,1], index: 2, kind: input, shape index: {}]
  %s3 = inlined_call_operand.vmem [shape: f32[20,40], index: 3, kind: input, shape index: {}]
  %s4 = inlined_call_operand.vmem [shape: f32[20,1], index: 4, kind: input, shape index: {}]
  %s5 = inlined_call_operand.vmem [shape: f32[1,20], index: 5, kind: input, shape index: {}]
  %s6 = inlined_call_operand.<no memory space> [shape: f32[1,1], index: 6, kind: input, shape index: {}]
  %s7 = inlined_call_operand.hbm [shape: f32[1,300], index: 7, kind: output, shape index: {}]
  %s8 = sld [smem:[#allocation0]]
  $region61: #{tpu_custom_call.1} parent=0
    _
  %s10 = ssub.s32 1, %s8
  %s11 = scalar_select 0, %s10, %s8
  %12 = sst [smem:[#allocation2]] %s6
  $region1: #{tpu_custom_call.1} parent=0
    #allocation3 [shape = 'u8[2048]{0}', space=vmem, size = 0x800, scoped, tag = 'output window, operand 0']
    #allocation4 [shape = 's32[2]{0}', space=sflag, size = 0x8, scoped, tag = 'scoped memory for tpu_custom_call.1']
    %13 = vsyncpa [#allocation4], 0
    %s14 = scalar_lea.sflag [#allocation4], 1
    %15 = vsyncpa %s14, 0
    loop: start=0, step=1, limit=4
    $region2: #{tpu_custom_call.1} parent=1 // loop_pre_header
      _
    $region3: #{tpu_custom_call.1} parent=1 // loop_header
      %s17 = sphi 0, %s21
      %p18 = scmp.ge.s32.totalorder %s17, 4
      %s27 = sphi 0, %s29
      %s30 = sphi 0, %s27
      %s31 = sphi 0, %s30
      %s47 = sphi 0, %s31
      %s51 = sphi 0, %s51
      %s53 = sphi 0, %s51
      %s54 = sphi 0, %s53
      %s68 = sphi 0, %s54
      %s72 = sphi 0, %s72
      %s74 = sphi 0, %s72
      %s75 = sphi 0, %s74
      %s89 = sphi 0, %s75
      %s93 = sphi 0, %s93
      %s95 = sphi 0, %s93
      %s96 = sphi 0, %s95
      %s110 = sphi 0, %s96
      %s114 = sphi 0, %s114
      %s116 = sphi 0, %s114
      %s117 = sphi 0, %s116
      %s131 = sphi 0, %s117
      %s135 = sphi 0, %s135
      %s137 = sphi 0, %s135
      %s138 = sphi 0, %s137
      %s152 = sphi 0, %s138
      %s156 = sphi 0, %s156
      %s158 = sphi 0, %s156
      %s159 = sphi 0, %s158
      %s173 = sphi 0, %s159
      %s179 = sphi 0, %s181
      %s182 = sphi 0, %s179
      %s183 = sphi 0, %s182
      %s199 = sphi 0, %s183
    $region4: #{tpu_custom_call.1} parent=1 // loop_header_branch
      %20 = sbr.rel (%p18) target = $region8
    $region5: #{tpu_custom_call.1} parent=1 // loop_body
      %s22 = ssub.s32 %s17, 1
      %s23 = ssub.s32 %s17, 2
      %s24 = sadd.s32 %s17, 1
      %s25 = ssub.s32 %s17, %s24
      %p26 = scmp.eq.s32.totalorder %s25, 0
      %s28 = sadd.s32 %s27, 1
      %s29 = scalar_select %p26, %s27, %s28
      %p32 = pneg %p26
      %p33 = scmp.eq.s32.totalorder %s17, 1
      %p34 = por %p32, %p33
      %p35 = scmp.ne.s32.totalorder %s27, %s30
      %p36 = scmp.eq.s32.totalorder %s17, 0
      %p37 = por %p35, %p36
      %p38 = scmp.ne.s32.totalorder %s27, %s30
      %p39 = scmp.eq.s32.totalorder %s22, 1
      %p40 = por %p38, %p39
      %p41 = scmp.ne.s32.totalorder %s30, %s31
      %p42 = scmp.eq.s32.totalorder %s22, 0
      %p43 = por %p41, %p42
      %p44 = scmp.ne.s32.totalorder %s30, %s31
      %p45 = scmp.eq.s32.totalorder %s23, 1
      %p46 = por %p44, %p45
      %p48 = scmp.ne.s32.totalorder %s31, %s47
      %p49 = scmp.eq.s32.totalorder %s23, 0
      %p50 = por %p48, %p49
      %s52 = sadd.s32 %s51, 1
      %p55 = scmp.eq.s32.totalorder %s17, 1
      %p56 = scmp.ne.s32.totalorder %s51, %s53
      %p57 = scmp.eq.s32.totalorder %s17, 0
      %p58 = por %p56, %p57
      %p59 = scmp.ne.s32.totalorder %s51, %s53
      %p60 = scmp.eq.s32.totalorder %s22, 1
      %p61 = por %p59, %p60
      %p62 = scmp.ne.s32.totalorder %s53, %s54
      %p63 = scmp.eq.s32.totalorder %s22, 0
      %p64 = por %p62, %p63
      %p65 = scmp.ne.s32.totalorder %s53, %s54
      %p66 = scmp.eq.s32.totalorder %s23, 1
      %p67 = por %p65, %p66
      %p69 = scmp.ne.s32.totalorder %s54, %s68
      %p70 = scmp.eq.s32.totalorder %s23, 0
      %p71 = por %p69, %p70
      %s73 = sadd.s32 %s72, 1
      %p76 = scmp.eq.s32.totalorder %s17, 1
      %p77 = scmp.ne.s32.totalorder %s72, %s74
      %p78 = scmp.eq.s32.totalorder %s17, 0
      %p79 = por %p77, %p78
      %p80 = scmp.ne.s32.totalorder %s72, %s74
      %p81 = scmp.eq.s32.totalorder %s22, 1
      %p82 = por %p80, %p81
      %p83 = scmp.ne.s32.totalorder %s74, %s75
      %p84 = scmp.eq.s32.totalorder %s22, 0
      %p85 = por %p83, %p84
      %p86 = scmp.ne.s32.totalorder %s74, %s75
      %p87 = scmp.eq.s32.totalorder %s23, 1
      %p88 = por %p86, %p87
      %p90 = scmp.ne.s32.totalorder %s75, %s89
      %p91 = scmp.eq.s32.totalorder %s23, 0
      %p92 = por %p90, %p91
      %s94 = sadd.s32 %s93, 1
      %p97 = scmp.eq.s32.totalorder %s17, 1
      %p98 = scmp.ne.s32.totalorder %s93, %s95
      %p99 = scmp.eq.s32.totalorder %s17, 0
      %p100 = por %p98, %p99
      %p101 = scmp.ne.s32.totalorder %s93, %s95
      %p102 = scmp.eq.s32.totalorder %s22, 1
      %p103 = por %p101, %p102
      %p104 = scmp.ne.s32.totalorder %s95, %s96
      %p105 = scmp.eq.s32.totalorder %s22, 0
      %p106 = por %p104, %p105
      %p107 = scmp.ne.s32.totalorder %s95, %s96
      %p108 = scmp.eq.s32.totalorder %s23, 1
      %p109 = por %p107, %p108
      %p111 = scmp.ne.s32.totalorder %s96, %s110
      %p112 = scmp.eq.s32.totalorder %s23, 0
      %p113 = por %p111, %p112
      %s115 = sadd.s32 %s114, 1
      %p118 = scmp.eq.s32.totalorder %s17, 1
      %p119 = scmp.ne.s32.totalorder %s114, %s116
      %p120 = scmp.eq.s32.totalorder %s17, 0
      %p121 = por %p119, %p120
      %p122 = scmp.ne.s32.totalorder %s114, %s116
      %p123 = scmp.eq.s32.totalorder %s22, 1
      %p124 = por %p122, %p123
      %p125 = scmp.ne.s32.totalorder %s116, %s117
      %p126 = scmp.eq.s32.totalorder %s22, 0
      %p127 = por %p125, %p126
      %p128 = scmp.ne.s32.totalorder %s116, %s117
      %p129 = scmp.eq.s32.totalorder %s23, 1
      %p130 = por %p128, %p129
      %p132 = scmp.ne.s32.totalorder %s117, %s131
      %p133 = scmp.eq.s32.totalorder %s23, 0
      %p134 = por %p132, %p133
      %s136 = sadd.s32 %s135, 1
      %p139 = scmp.eq.s32.totalorder %s17, 1
      %p140 = scmp.ne.s32.totalorder %s135, %s137
      %p141 = scmp.eq.s32.totalorder %s17, 0
      %p142 = por %p140, %p141
      %p143 = scmp.ne.s32.totalorder %s135, %s137
      %p144 = scmp.eq.s32.totalorder %s22, 1
      %p145 = por %p143, %p144
      %p146 = scmp.ne.s32.totalorder %s137, %s138
      %p147 = scmp.eq.s32.totalorder %s22, 0
      %p148 = por %p146, %p147
      %p149 = scmp.ne.s32.totalorder %s137, %s138
      %p150 = scmp.eq.s32.totalorder %s23, 1
      %p151 = por %p149, %p150
      %p153 = scmp.ne.s32.totalorder %s138, %s152
      %p154 = scmp.eq.s32.totalorder %s23, 0
      %p155 = por %p153, %p154
      %s157 = sadd.s32 %s156, 1
      %p160 = scmp.eq.s32.totalorder %s17, 1
      %p161 = scmp.ne.s32.totalorder %s156, %s158
      %p162 = scmp.eq.s32.totalorder %s17, 0
      %p163 = por %p161, %p162
      %p164 = scmp.ne.s32.totalorder %s156, %s158
      %p165 = scmp.eq.s32.totalorder %s22, 1
      %p166 = por %p164, %p165
      %p167 = scmp.ne.s32.totalorder %s158, %s159
      %p168 = scmp.eq.s32.totalorder %s22, 0
      %p169 = por %p167, %p168
      %p170 = scmp.ne.s32.totalorder %s158, %s159
      %p171 = scmp.eq.s32.totalorder %s23, 1
      %p172 = por %p170, %p171
      %p174 = scmp.ne.s32.totalorder %s159, %s173
      %p175 = scmp.eq.s32.totalorder %s23, 0
      %p176 = por %p174, %p175
      %s177 = ssub.s32 %s17, %s24
      %p178 = scmp.eq.s32.totalorder %s177, 0
      %s180 = sadd.s32 %s179, 1
      %s181 = scalar_select %p178, %s179, %s180
      %p184 = pneg %p178
      %p185 = scmp.eq.s32.totalorder %s17, 1
      %p186 = por %p184, %p185
      %p187 = scmp.ne.s32.totalorder %s179, %s182
      %p188 = scmp.eq.s32.totalorder %s17, 0
      %p189 = por %p187, %p188
      %p190 = scmp.ne.s32.totalorder %s179, %s182
      %p191 = scmp.eq.s32.totalorder %s22, 1
      %p192 = por %p190, %p191
      %p193 = scmp.ne.s32.totalorder %s182, %s183
      %p194 = scmp.eq.s32.totalorder %s22, 0
      %p195 = por %p193, %p194
      %p196 = scmp.ne.s32.totalorder %s182, %s183
      %p197 = scmp.eq.s32.totalorder %s23, 1
      %p198 = por %p196, %p197
      %p200 = scmp.ne.s32.totalorder %s183, %s199
      %p201 = scmp.eq.s32.totalorder %s23, 0
      %p202 = por %p200, %p201
      %p203 = scmp.le.s32.totalorder 1, %s17
      %p204 = scmp.lt.s32.totalorder %s17, 3
      %p205 = pnand %p203, %p204
      %p206 = pneg %p205
      // Predicated region
      $region9: #{tpu_custom_call.1} parent=5 // pred_check
        _
      $region10: #{tpu_custom_call.1} parent=5 // pred_check_branch
        %208 = sbr.rel (%p205) target = $region12
      $region11: #{tpu_custom_call.1} parent=5 // pred_region
        %s209 = ssub.s32 %s17, 1
        // Predicated region
        $region13: #{tpu_custom_call.1} parent=11 // pred_check
          %p210 = pneg %p64
        $region14: #{tpu_custom_call.1} parent=11 // pred_check_branch
          %212 = sbr.rel (%p210) target = $region16
        $region15: #{tpu_custom_call.1} parent=11 // pred_region
          _
        $region16: #{tpu_custom_call.1} parent=11 // pred_fallthru
          _
        // Predicated region
        $region17: #{tpu_custom_call.1} parent=11 // pred_check
          %p213 = pneg %p85
        $region18: #{tpu_custom_call.1} parent=11 // pred_check_branch
          %215 = sbr.rel (%p213) target = $region20
        $region19: #{tpu_custom_call.1} parent=11 // pred_region
          _
        $region20: #{tpu_custom_call.1} parent=11 // pred_fallthru
          _
        // Predicated region
        $region21: #{tpu_custom_call.1} parent=11 // pred_check
          %p216 = pneg %p106
        $region22: #{tpu_custom_call.1} parent=11 // pred_check_branch
          %218 = sbr.rel (%p216) target = $region24
        $region23: #{tpu_custom_call.1} parent=11 // pred_region
          _
        $region24: #{tpu_custom_call.1} parent=11 // pred_fallthru
          _
        // Predicated region
        $region25: #{tpu_custom_call.1} parent=11 // pred_check
          %p219 = pneg %p127
        $region26: #{tpu_custom_call.1} parent=11 // pred_check_branch
          %221 = sbr.rel (%p219) target = $region28
        $region27: #{tpu_custom_call.1} parent=11 // pred_region
          _
        $region28: #{tpu_custom_call.1} parent=11 // pred_fallthru
          _
        // Predicated region
        $region29: #{tpu_custom_call.1} parent=11 // pred_check
          %p222 = pneg %p148
        $region30: #{tpu_custom_call.1} parent=11 // pred_check_branch
          %224 = sbr.rel (%p222) target = $region32
        $region31: #{tpu_custom_call.1} parent=11 // pred_region
          _
        $region32: #{tpu_custom_call.1} parent=11 // pred_fallthru
          _
        // Predicated region
        $region33: #{tpu_custom_call.1} parent=11 // pred_check
          %p225 = pneg %p169
        $region34: #{tpu_custom_call.1} parent=11 // pred_check_branch
          %227 = sbr.rel (%p225) target = $region36
        $region35: #{tpu_custom_call.1} parent=11 // pred_region
          _
        $region36: #{tpu_custom_call.1} parent=11 // pred_fallthru
          _
      $region12: #{tpu_custom_call.1} parent=5 // pred_fallthru
        _
      %p228 = scmp.lt.s32.totalorder %s17, 2
      // Predicated region
      $region37: #{tpu_custom_call.1} parent=5 // pred_check
        %p229 = pneg %p228
      $region38: #{tpu_custom_call.1} parent=5 // pred_check_branch
        %231 = sbr.rel (%p229) target = $region40
      $region39: #{tpu_custom_call.1} parent=5 // pred_region
        // Predicated region
        $region41: #{tpu_custom_call.1} parent=39 // pred_check
          %p232 = pneg %p37
        $region42: #{tpu_custom_call.1} parent=39 // pred_check_branch
          %234 = sbr.rel (%p232) target = $region44
        $region43: #{tpu_custom_call.1} parent=39 // pred_region
          %s235 = smul.u32 32, %s17
          %s236 = ssub.s32 38, %s235
          %p237 = scmp.lt.s32.totalorder %s236, 32
          %s238 = scalar_select %p237, %s236, 32
          %s239 = smul.u32 128, %s238
          %p240 = scmp.lt.s32.totalorder %s235, 37
          %s241 = scalar_select %p240, %s235, 37
          %s242 = smul.addr %s241, 8
          %s243 = scalar_lea.vmem %s0, %s242
          %s244 = smul.u32 32, %s17
          %s245 = ssub.s32 38, %s244
          %p246 = scmp.lt.s32.totalorder %s245, 32
          %s247 = scalar_select %p246, %s245, 32
          %s248 = smul.u32 128, %s247
        $region44: #{tpu_custom_call.1} parent=39 // pred_fallthru
          _
      $region40: #{tpu_custom_call.1} parent=5 // pred_fallthru
        _
      %p249 = scmp.le.s32.totalorder 1, %s17
      %p250 = scmp.lt.s32.totalorder %s17, 3
      %p251 = pnand %p249, %p250
      %p252 = pneg %p251
      // Predicated region
      $region45: #{tpu_custom_call.1} parent=5 // pred_check
        _
      $region46: #{tpu_custom_call.1} parent=5 // pred_check_branch
        %254 = sbr.rel (%p251) target = $region48
      $region47: #{tpu_custom_call.1} parent=5 // pred_region
        %s255 = ssub.s32 %s17, 1
        %s256 = smul.u32 32, %s22
        %s257 = ssub.s32 38, %s256
        %p258 = scmp.lt.s32.totalorder %s257, 32
        %s259 = scalar_select %p258, %s257, 32
        %s260 = smul.u32 128, %s259
        %p261 = scmp.lt.s32.totalorder %s256, 37
        %s262 = scalar_select %p261, %s256, 37
        %s263 = smul.addr %s262, 8
        %s264 = scalar_lea.vmem %s0, %s263
        %p265 = pneg %p43
        %p266 = pneg %p40
        %p267 = pneg %p64
        %p268 = pneg %p61
        %p269 = pneg %p85
        %p270 = pneg %p82
        %p271 = pneg %p106
        %p272 = pneg %p103
        %p273 = pneg %p127
        %p274 = pneg %p124
        %p275 = pneg %p148
        %p276 = pneg %p145
        %p277 = pneg %p169
        %p278 = pneg %p166
        %p279 = pneg %p195
        %p280 = pneg %p192
        %s281 = sand.u32 %s182, 1
        %s282 = scalar_lea.sflag [#allocation4], %s281
        %s283 = sand.u32 %s182, 1
        %s284 = smul.addr %s283, 2
        %s285 = scalar_lea.vmem [#allocation3], %s284
        %s286 = smul.u32 32, %s22
        %s287 = ssub.s32 38, %s286
        %p288 = scmp.lt.s32.totalorder %s287, 32
        %s289 = scalar_select %p288, %s287, 32
        %s290 = smul.u32 128, %s289
        %p291 = scmp.lt.s32.totalorder %s286, 37
        %s292 = scalar_select %p291, %s286, 37
        %s293 = smul.addr %s292, 8
        %s294 = scalar_lea.vmem %s0, %s293
        %s295 = smul.u32 32, %s22
        %s296 = ssub.s32 38, %s295
        %p297 = scmp.lt.s32.totalorder %s296, 32
        %s298 = scalar_select %p297, %s296, 32
        %s299 = smul.u32 128, %s298
        %s300 = smul.u32 2, %s22
        %s301 = ssub.s32 3, %s300
        %p302 = scmp.lt.s32.totalorder %s301, 2
        %s303 = scalar_select %p302, %s301, 2
        %s304 = smul.u32 16, %s303
        %v305 = vld [vmem:[%s294] sm:$0xff]
        %v306 = vld [vmem:[%s294 + $0x8] sm:$0xff]
        %v307 = vld [vmem:[%s294 + $0x10] sm:$0xff]
        %v308 = vld [vmem:[%s294 + $0x18] sm:$0xff]
        %v309 = vld [vmem:[%s294 + $0x20] sm:$0xff]
        %v310 = vld [vmem:[%s294 + $0x28] sm:$0xff]
        %v311 = vld [vmem:[%s294 + $0x30] sm:$0xff]
        %v312 = vld [vmem:[%s294 + $0x38] sm:$0xff]
        %v313 = vld [vmem:[%s294 + $0x40] sm:$0xff]
        %v314 = vld [vmem:[%s294 + $0x48] sm:$0xff]
        %v315 = vld [vmem:[%s294 + $0x50] sm:$0xff]
        %v316 = vld [vmem:[%s294 + $0x58] sm:$0xff]
        %v317 = vld [vmem:[%s294 + $0x60] sm:$0xff]
        %v318 = vld [vmem:[%s294 + $0x68] sm:$0xff]
        %v319 = vld [vmem:[%s294 + $0x70] sm:$0xff]
        %v320 = vld [vmem:[%s294 + $0x78] sm:$0xff]
        %v321 = vld [vmem:[%s294 + $0x80] sm:$0xff]
        %v322 = vld [vmem:[%s294 + $0x88] sm:$0xff]
        %v323 = vld [vmem:[%s294 + $0x90] sm:$0xff]
        %v324 = vld [vmem:[%s294 + $0x98] sm:$0xff]
        %v325 = vld [vmem:[%s294 + $0xa0] sm:$0xff]
        %v326 = vld [vmem:[%s294 + $0xa8] sm:$0xff]
        %v327 = vld [vmem:[%s294 + $0xb0] sm:$0xff]
        %v328 = vld [vmem:[%s294 + $0xb8] sm:$0xff]
        %v329 = vld [vmem:[%s294 + $0xc0] sm:$0xff]
        %v330 = vld [vmem:[%s294 + $0xc8] sm:$0xff]
        %v331 = vld [vmem:[%s294 + $0xd0] sm:$0xff]
        %v332 = vld [vmem:[%s294 + $0xd8] sm:$0xff]
        %v333 = vld [vmem:[%s294 + $0xe0] sm:$0xff]
        %v334 = vld [vmem:[%s294 + $0xe8] sm:$0xff]
        %v335 = vld [vmem:[%s294 + $0xf0] sm:$0xff]
        %v336 = vld [vmem:[%s294 + $0xf8] sm:$0xff]
        %v337 = vld [vmem:[%s1] sm:$0xff]
        %v338 = vld [vmem:[%s1 + $0x8] sm:$0xff]
        %v339 = vld [vmem:[%s1 + $0x10] sm:$0xff]
        %v340 = vld [vmem:[%s1 + $0x18] sm:$0xff]
        %v341 = vld [vmem:[%s1 + $0x20] sm:$0xff]
        %v342 = vld [vmem:[%s2] sm:$0xff]
        %v343 = vld [vmem:[%s2 + $0x8] sm:$0xff]
        %v344 = vld [vmem:[%s2 + $0x10] sm:$0xff]
        %v345 = vld [vmem:[%s2 + $0x18] sm:$0xff]
        %v346 = vld [vmem:[%s2 + $0x20] sm:$0xff]
        %348 = vset.pattern.permute.xlu0 0
        %349 = vperm.xlu0 %348, %v342
        %v350 = vpop.permute.xlu0 %349
        %353 = vset.pattern.permute.xlu0 0
        %354 = vperm.xlu0 %353, %v343
        %v355 = vpop.permute.xlu0 %354
        %358 = vset.pattern.permute.xlu0 0
        %359 = vperm.xlu0 %358, %v344
        %v360 = vpop.permute.xlu0 %359
        %363 = vset.pattern.permute.xlu0 0
        %364 = vperm.xlu0 %363, %v345
        %v365 = vpop.permute.xlu0 %364
        %368 = vset.pattern.permute.xlu0 0
        %369 = vperm.xlu0 %368, %v346
        %v370 = vpop.permute.xlu0 %369
        %vm372 = vcmask 39936
        %v374 = vsel %vm372, %v337, 0
        %v377 = vsel %vm372, %v338, 0
        %v380 = vsel %vm372, %v339, 0
        %v383 = vsel %vm372, %v340, 0
        %v386 = vsel %vm372, %v341, 0
        %v389 = vsel %vm372, %v305, 0
        %v392 = vsel %vm372, %v306, 0
        %v395 = vsel %vm372, %v307, 0
        %v398 = vsel %vm372, %v308, 0
        %v401 = vsel %vm372, %v309, 0
        %v404 = vsel %vm372, %v310, 0
        %v407 = vsel %vm372, %v311, 0
        %v410 = vsel %vm372, %v312, 0
        %v413 = vsel %vm372, %v313, 0
        %v416 = vsel %vm372, %v314, 0
        %v419 = vsel %vm372, %v315, 0
        %v422 = vsel %vm372, %v316, 0
        %v425 = vsel %vm372, %v317, 0
        %v428 = vsel %vm372, %v318, 0
        %v431 = vsel %vm372, %v319, 0
        %v434 = vsel %vm372, %v320, 0
        %v437 = vsel %vm372, %v321, 0
        %v440 = vsel %vm372, %v322, 0
        %v443 = vsel %vm372, %v323, 0
        %v446 = vsel %vm372, %v324, 0
        %v449 = vsel %vm372, %v325, 0
        %v452 = vsel %vm372, %v326, 0
        %v455 = vsel %vm372, %v327, 0
        %v458 = vsel %vm372, %v328, 0
        %v461 = vsel %vm372, %v329, 0
        %v464 = vsel %vm372, %v330, 0
        %v467 = vsel %vm372, %v331, 0
        %v470 = vsel %vm372, %v332, 0
        %v473 = vsel %vm372, %v333, 0
        %v476 = vsel %vm372, %v334, 0
        %v479 = vsel %vm372, %v335, 0
        %v482 = vsel %vm372, %v336, 0
        %484 = vmatprep.subr.mxu0 0.0
        %485 = vmatpush1.xpose.msra.mxu0 %v389
        %486 = vmatprep.subr.mxu0 0.0
        %487 = vmatpush1.xpose.msra.mxu0 %v392
        %488 = vmatprep.subr.mxu0 0.0
        %489 = vmatpush1.xpose.msra.mxu0 %v395
        %490 = vmatprep.subr.mxu0 0.0
        %491 = vmatpush1.xpose.msra.mxu0 %v398
        %492 = vmatprep.subr.mxu0 0.0
        %493 = vmatpush1.xpose.msra.mxu0 %v401
        %494 = vmatprep.subr.mxu0 0.0
        %495 = vmatpush1.xpose.msra.mxu0 %v404
        %496 = vmatprep.subr.mxu0 0.0
        %497 = vmatpush1.xpose.msra.mxu0 %v407
        %498 = vmatprep.subr.mxu0 0.0
        %499 = vmatpush1.xpose.msra.mxu0 %v410
        %500 = vmatprep.subr.mxu0 0.0
        %501 = vmatpush1.xpose.msra.mxu0 %v413
        %502 = vmatprep.subr.mxu0 0.0
        %503 = vmatpush1.xpose.msra.mxu0 %v416
        %504 = vmatprep.subr.mxu0 0.0
        %505 = vmatpush1.xpose.msra.mxu0 %v419
        %506 = vmatprep.subr.mxu0 0.0
        %507 = vmatpush1.xpose.msra.mxu0 %v422
        %508 = vmatprep.subr.mxu0 0.0
        %509 = vmatpush1.xpose.msra.mxu0 %v425
        %510 = vmatprep.subr.mxu0 0.0
        %511 = vmatpush1.xpose.msra.mxu0 %v428
        %512 = vmatprep.subr.mxu0 0.0
        %513 = vmatpush1.xpose.msra.mxu0 %v431
        %514 = vmatprep.subr.mxu0 0.0
        %515 = vmatpush1.xpose.msra.mxu0 %v434
        %516 = vmatprep.subr.mxu0 0.0
        %517 = vmatpush1.xpose.msra.mxu0 %v437
        %518 = vmatprep.subr.mxu0 0.0
        %519 = vmatpush1.xpose.msra.mxu0 %v440
        %520 = vmatprep.subr.mxu0 0.0
        %521 = vmatpush1.xpose.msra.mxu0 %v443
        %522 = vmatprep.subr.mxu0 0.0
        %523 = vmatpush1.xpose.msra.mxu0 %v446
        %524 = vmatprep.subr.mxu0 0.0
        %525 = vmatpush1.xpose.msra.mxu0 %v449
        %526 = vmatprep.subr.mxu0 0.0
        %527 = vmatpush1.xpose.msra.mxu0 %v452
        %528 = vmatprep.subr.mxu0 0.0
        %529 = vmatpush1.xpose.msra.mxu0 %v455
        %530 = vmatprep.subr.mxu0 0.0
        %531 = vmatpush1.xpose.msra.mxu0 %v458
        %532 = vmatprep.subr.mxu0 0.0
        %533 = vmatpush1.xpose.msra.mxu0 %v461
        %534 = vmatprep.subr.mxu0 0.0
        %535 = vmatpush1.xpose.msra.mxu0 %v464
        %536 = vmatprep.subr.mxu0 0.0
        %537 = vmatpush1.xpose.msra.mxu0 %v467
        %538 = vmatprep.subr.mxu0 0.0
        %539 = vmatpush1.xpose.msra.mxu0 %v470
        %540 = vmatprep.subr.mxu0 0.0
        %541 = vmatpush1.xpose.msra.mxu0 %v473
        %542 = vmatprep.subr.mxu0 0.0
        %543 = vmatpush1.xpose.msra.mxu0 %v476
        %544 = vmatprep.subr.mxu0 0.0
        %545 = vmatpush1.xpose.msra.mxu0 %v479
        %546 = vmatprep.subr.mxu0 0.0
        %547 = vmatpush1.xpose.msra.mxu0 %v482
        %548 = vmatprep.mubr.f32.mxu0 0.0
        %549 = vmatmul.mubr.f32.gmra.mrb[0].mxu0 %v374
        %v550 = vpop.f32.mrb[0].mxu0
        %v551 = vadd.f32 %v350, %v550
        %v552 = vpop.f32.mrb[0].mxu0
        %v553 = vadd.f32 %v350, %v552
        %554 = vmatprep.mubr.f32.mxu0 0.0
        %555 = vmatmul.mubr.f32.gmra.mrb[0].mxu0 %v377
        %v556 = vpop.f32.mrb[0].mxu0
        %v557 = vadd.f32 %v355, %v556
        %v558 = vpop.f32.mrb[0].mxu0
        %v559 = vadd.f32 %v355, %v558
        %560 = vmatprep.mubr.f32.mxu0 0.0
        %561 = vmatmul.mubr.f32.gmra.mrb[0].mxu0 %v380
        %v562 = vpop.f32.mrb[0].mxu0
        %v563 = vadd.f32 %v360, %v562
        %v564 = vpop.f32.mrb[0].mxu0
        %v565 = vadd.f32 %v360, %v564
        %566 = vmatprep.mubr.f32.mxu0 0.0
        %567 = vmatmul.mubr.f32.gmra.mrb[0].mxu0 %v383
        %v568 = vpop.f32.mrb[0].mxu0
        %v569 = vadd.f32 %v365, %v568
        %v570 = vpop.f32.mrb[0].mxu0
        %v571 = vadd.f32 %v365, %v570
        %572 = vmatprep.mubr.f32.mxu0 0.0
        %573 = vmatmul.mubr.f32.gmra.mrb[0].mxu0 %v386
        %v574 = vpop.f32.mrb[0].mxu0
        %v575 = vadd.f32 %v370, %v574
        %v576 = vpop.f32.mrb[0].mxu0
        %v577 = vadd.f32 %v370, %v576
        %578 = vdwg.mxu0
        %v579 = vmax.f32 %v551, 0.0
        %v580 = vmax.f32 %v553, 0.0
        %v581 = vmax.f32 %v557, 0.0
        %v582 = vmax.f32 %v559, 0.0
        %v583 = vmax.f32 %v563, 0.0
        %v584 = vmax.f32 %v565, 0.0
        %v585 = vmax.f32 %v569, 0.0
        %v586 = vmax.f32 %v571, 0.0
        %v587 = vmax.f32 %v575, 0.0
        %v588 = vmax.f32 %v577, 0.0
        %v589 = vld [vmem:[%s3] sm:$0xff]
        %v590 = vld [vmem:[%s3 + $0x8] sm:$0xff]
        %v591 = vld [vmem:[%s3 + $0x10] sm:$0xf]
        %v592 = vld [vmem:[%s4] sm:$0xff]
        %v593 = vld [vmem:[%s4 + $0x8] sm:$0xff]
        %v594 = vld [vmem:[%s4 + $0x10] sm:$0xf]
        %596 = vset.pattern.permute.xlu0 0
        %597 = vperm.xlu0 %596, %v592
        %v598 = vpop.permute.xlu0 %597
        %601 = vset.pattern.permute.xlu0 0
        %602 = vperm.xlu0 %601, %v593
        %v603 = vpop.permute.xlu0 %602
        %606 = vset.pattern.permute.xlu0 0
        %607 = vperm.xlu0 %606, %v594
        %v608 = vpop.permute.xlu0 %607
        %vm610 = vcmask 326656
        %v612 = vsel %vm610, %v589, 0
        %v615 = vsel %vm610, %v590, 0
        %v618 = vsel %vm610, %v591, 0
        %620 = vmatprep.subr.mxu0 %v580
        %621 = vmatpush1.msra.mxu0 %v579
        %622 = vmatprep.subr.mxu0 %v582
        %623 = vmatpush1.msra.mxu0 %v581
        %624 = vmatprep.subr.mxu0 %v584
        %625 = vmatpush1.msra.mxu0 %v583
        %626 = vmatprep.subr.mxu0 %v586
        %627 = vmatpush1.msra.mxu0 %v585
        %628 = vmatprep.subr.mxu0 %v588
        %629 = vmatpush1.msra.mxu0 %v587
        %630 = vmatprep.subr.mxu0 0.0
        %631 = vmatpush1.msra.mxu0 0.0
        %632 = vmatprep.subr.mxu0 0.0
        %633 = vmatpush1.msra.mxu0 0.0
        %634 = vmatprep.subr.mxu0 0.0
        %635 = vmatpush1.msra.mxu0 0.0
        %636 = vmatprep.subr.mxu0 0.0
        %637 = vmatpush1.msra.mxu0 0.0
        %638 = vmatprep.subr.mxu0 0.0
        %639 = vmatpush1.msra.mxu0 0.0
        %640 = vmatprep.subr.mxu0 0.0
        %641 = vmatpush1.msra.mxu0 0.0
        %642 = vmatprep.subr.mxu0 0.0
        %643 = vmatpush1.msra.mxu0 0.0
        %644 = vmatprep.subr.mxu0 0.0
        %645 = vmatpush1.msra.mxu0 0.0
        %646 = vmatprep.subr.mxu0 0.0
        %647 = vmatpush1.msra.mxu0 0.0
        %648 = vmatprep.subr.mxu0 0.0
        %649 = vmatpush1.msra.mxu0 0.0
        %650 = vmatprep.subr.mxu0 0.0
        %651 = vmatpush1.msra.mxu0 0.0
        %652 = vmatprep.subr.mxu0 0.0
        %653 = vmatpush1.msra.mxu0 0.0
        %654 = vmatprep.subr.mxu0 0.0
        %655 = vmatpush1.msra.mxu0 0.0
        %656 = vmatprep.subr.mxu0 0.0
        %657 = vmatpush1.msra.mxu0 0.0
        %658 = vmatprep.subr.mxu0 0.0
        %659 = vmatpush1.msra.mxu0 0.0
        %660 = vmatprep.subr.mxu0 0.0
        %661 = vmatpush1.msra.mxu0 0.0
        %662 = vmatprep.subr.mxu0 0.0
        %663 = vmatpush1.msra.mxu0 0.0
        %664 = vmatprep.subr.mxu0 0.0
        %665 = vmatpush1.msra.mxu0 0.0
        %666 = vmatprep.subr.mxu0 0.0
        %667 = vmatpush1.msra.mxu0 0.0
        %668 = vmatprep.subr.mxu0 0.0
        %669 = vmatpush1.msra.mxu0 0.0
        %670 = vmatprep.subr.mxu0 0.0
        %671 = vmatpush1.msra.mxu0 0.0
        %672 = vmatprep.subr.mxu0 0.0
        %673 = vmatpush1.msra.mxu0 0.0
        %674 = vmatprep.subr.mxu0 0.0
        %675 = vmatpush1.msra.mxu0 0.0
        %676 = vmatprep.subr.mxu0 0.0
        %677 = vmatpush1.msra.mxu0 0.0
        %678 = vmatprep.subr.mxu0 0.0
        %679 = vmatpush1.msra.mxu0 0.0
        %680 = vmatprep.subr.mxu0 0.0
        %681 = vmatpush1.msra.mxu0 0.0
        %682 = vmatprep.subr.mxu0 0.0
        %683 = vmatpush1.msra.mxu0 0.0
        %684 = vmatprep.mubr.f32.mxu0 0.0
        %685 = vmatmul.mubr.f32.gmra.mrb[0].mxu0 %v612
        %v686 = vpop.f32.mrb[0].mxu0
        %v687 = vadd.f32 %v598, %v686
        %v688 = vpop.f32.mrb[0].mxu0
        %v689 = vadd.f32 %v598, %v688
        %690 = vmatprep.mubr.f32.mxu0 0.0
        %691 = vmatmul.mubr.f32.gmra.mrb[0].mxu0 %v615
        %v692 = vpop.f32.mrb[0].mxu0
        %v693 = vadd.f32 %v603, %v692
        %v694 = vpop.f32.mrb[0].mxu0
        %v695 = vadd.f32 %v603, %v694
        %696 = vmatprep.mubr.f32.mxu0 0.0
        %697 = vmatmul.mubr.f32.gmra.mrb[0].mxu0 %v618
        %v698 = vpop.f32.mrb[0].mxu0
        %v699 = vadd.f32 %v608, %v698
        %v700 = vpop.f32.mrb[0].mxu0
        %v701 = vadd.f32 %v608, %v700
        %702 = vdwg.mxu0
        %v703 = vmax.f32 %v687, 0.0
        %v704 = vmax.f32 %v689, 0.0
        %v705 = vmax.f32 %v693, 0.0
        %v706 = vmax.f32 %v695, 0.0
        %v707 = vmax.f32 %v699, 0.0
        %v708 = vmax.f32 %v701, 0.0
        %v709 = vld [vmem:[%s5] sm:$0x1]
        %s710 = sld [smem:[#allocation2]]
        %v711 = vstv %s710
        %vm712 = vcmask 162816
        %v714 = vsel %vm712, %v709, 0
        %vm716 = vcmask 1043456
        %v718 = vsel %vm716, %v707, 0
        %v721 = vsel %vm716, %v708, 0
        %723 = vmatprep.subr.mxu0 %v704
        %724 = vmatpush1.msra.mxu0 %v703
        %725 = vmatprep.subr.mxu0 %v706
        %726 = vmatpush1.msra.mxu0 %v705
        %727 = vmatprep.subr.mxu0 %v721
        %728 = vmatpush1.msra.mxu0 %v718
        %729 = vmatprep.subr.mxu0 0.0
        %730 = vmatpush1.msra.mxu0 0.0
        %731 = vmatprep.subr.mxu0 0.0
        %732 = vmatpush1.msra.mxu0 0.0
        %733 = vmatprep.subr.mxu0 0.0
        %734 = vmatpush1.msra.mxu0 0.0
        %735 = vmatprep.subr.mxu0 0.0
        %736 = vmatpush1.msra.mxu0 0.0
        %737 = vmatprep.subr.mxu0 0.0
        %738 = vmatpush1.msra.mxu0 0.0
        %739 = vmatprep.subr.mxu0 0.0
        %740 = vmatpush1.msra.mxu0 0.0
        %741 = vmatprep.subr.mxu0 0.0
        %742 = vmatpush1.msra.mxu0 0.0
        %743 = vmatprep.subr.mxu0 0.0
        %744 = vmatpush1.msra.mxu0 0.0
        %745 = vmatprep.subr.mxu0 0.0
        %746 = vmatpush1.msra.mxu0 0.0
        %747 = vmatprep.subr.mxu0 0.0
        %748 = vmatpush1.msra.mxu0 0.0
        %749 = vmatprep.subr.mxu0 0.0
        %750 = vmatpush1.msra.mxu0 0.0
        %751 = vmatprep.subr.mxu0 0.0
        %752 = vmatpush1.msra.mxu0 0.0
        %753 = vmatprep.subr.mxu0 0.0
        %754 = vmatpush1.msra.mxu0 0.0
        %755 = vmatprep.subr.mxu0 0.0
        %756 = vmatpush1.msra.mxu0 0.0
        %757 = vmatprep.subr.mxu0 0.0
        %758 = vmatpush1.msra.mxu0 0.0
        %759 = vmatprep.subr.mxu0 0.0
        %760 = vmatpush1.msra.mxu0 0.0
        %761 = vmatprep.subr.mxu0 0.0
        %762 = vmatpush1.msra.mxu0 0.0
        %763 = vmatprep.subr.mxu0 0.0
        %764 = vmatpush1.msra.mxu0 0.0
        %765 = vmatprep.subr.mxu0 0.0
        %766 = vmatpush1.msra.mxu0 0.0
        %767 = vmatprep.subr.mxu0 0.0
        %768 = vmatpush1.msra.mxu0 0.0
        %769 = vmatprep.subr.mxu0 0.0
        %770 = vmatpush1.msra.mxu0 0.0
        %771 = vmatprep.subr.mxu0 0.0
        %772 = vmatpush1.msra.mxu0 0.0
        %773 = vmatprep.subr.mxu0 0.0
        %774 = vmatpush1.msra.mxu0 0.0
        %775 = vmatprep.subr.mxu0 0.0
        %776 = vmatpush1.msra.mxu0 0.0
        %777 = vmatprep.subr.mxu0 0.0
        %778 = vmatpush1.msra.mxu0 0.0
        %779 = vmatprep.subr.mxu0 0.0
        %780 = vmatpush1.msra.mxu0 0.0
        %781 = vmatprep.subr.mxu0 0.0
        %782 = vmatpush1.msra.mxu0 0.0
        %783 = vmatprep.subr.mxu0 0.0
        %784 = vmatpush1.msra.mxu0 0.0
        %785 = vmatprep.subr.mxu0 0.0
        %786 = vmatpush1.msra.mxu0 0.0
        %787 = vmatprep.mubr.f32.mxu0 0.0
        %788 = vmatmul.mubr.f32.gmra.mrb[0].mxu0 %v714
        %v789 = vpop.f32.mrb[0].mxu0
        %v790 = vadd.f32 %v711, %v789
        %v791 = vpop.f32.mrb[0].mxu0
        %v792 = vadd.f32 %v711, %v791
        %793 = vdwg.mxu0
        %v794 = vsub.f32 0.0, %v790
        %v795 = vsub.f32 0.0, %v792
        %v796 = vmul.f32 %v794, 1.442695
        %v797 = vpow.pop %v796
        %v798 = vmul.f32 %v795, 1.442695
        %v799 = vpow.pop %v798
        %v800 = vadd.f32 %v797, 1.0
        %v801 = vadd.f32 %v799, 1.0
        %v802 = vrcp.pop %v800
        %v803 = vmul.f32 1.0, %v802
        %v804 = vrcp.pop %v801
        %v805 = vmul.f32 1.0, %v804
        %v808 = vcombine.low %v803, %v805
        %v810 = vunpack.c.l.s4 1966171168
        %v811 = vunpack.c.0.s8 %v810
        %v812 = vlaneseq
        %v813 = vshrl.u32 %v812, 7
        %v814 = vsub.s32 %v811, %v813
        %v815 = vrot.slane %v808, %v814
        %v817 = vunpack.c.l.s4 1966171168
        %v818 = vunpack.c.0.s8 %v817
        %v819 = vlaneseq
        %v820 = vshrl.u32 %v819, 7
        %v821 = vsub.s32 %v818, %v820
        %v822 = vrot.slane %v815, %v821
        %v824 = vlaneseq
        %vm825 = vcmp.ge.s32.totalorder %v824, 0
        %vm826 = vcmp.lt.s32.totalorder %v824, 256
        %vm827 = vmand %vm825, %vm826
        %828 = vst.msk [vmem:[%s285] sm:$0x3] %vm827, %v822
        %s829 = sand.u32 %s182, 1
        %s830 = scalar_lea.sflag [#allocation4], %s829
        %s831 = sand.u32 %s182, 1
        %s832 = smul.addr %s831, 2
        %s833 = scalar_lea.vmem [#allocation3], %s832
        // Predicated region
        $region49: #{tpu_custom_call.1} parent=47 // pred_check
          %p834 = pneg %p192
        $region50: #{tpu_custom_call.1} parent=47 // pred_check_branch
          %836 = sbr.rel (%p834) target = $region52
        $region51: #{tpu_custom_call.1} parent=47 // pred_region
          %s837 = smul.u32 2, %s22
          %s838 = ssub.s32 3, %s837
          %p839 = scmp.lt.s32.totalorder %s838, 2
          %s840 = scalar_select %p839, %s838, 2
          %s841 = smul.u32 16, %s840
          %s843 = ssub.s32 32, %s841
          %844 = vsyncadd %s830, %s843
          %p845 = scmp.ne.s32.totalorder 0, %s841
          %s846 = smul.addr %s837, 16
          %s847 = scalar_lea.hbm %s7, %s846
          %s848 = sshll.u32 %s840, 4
          %s849 = sshll.u32 %s833, 4
          %s850 = int_to_ptr.vmem [resolvable:$true] %s849
          %852 = dma.vmem_to_hbm [thread:$0]  (%p845), %s850, %s848, %s847, %s830
        $region52: #{tpu_custom_call.1} parent=47 // pred_fallthru
          _
      $region48: #{tpu_custom_call.1} parent=5 // pred_fallthru
        _
      %p853 = scmp.le.s32.totalorder 2, %s17
      // Predicated region
      $region53: #{tpu_custom_call.1} parent=5 // pred_check
        %p854 = pneg %p853
      $region54: #{tpu_custom_call.1} parent=5 // pred_check_branch
        %856 = sbr.rel (%p854) target = $region56
      $region55: #{tpu_custom_call.1} parent=5 // pred_region
        %s857 = ssub.s32 %s17, 2
        // Predicated region
        $region57: #{tpu_custom_call.1} parent=55 // pred_check
          %p858 = pneg %p198
        $region58: #{tpu_custom_call.1} parent=55 // pred_check_branch
          %860 = sbr.rel (%p858) target = $region60
        $region59: #{tpu_custom_call.1} parent=55 // pred_region
          %s861 = sand.u32 %s183, 1
          %s862 = scalar_lea.sflag [#allocation4], %s861
          %s863 = sand.u32 %s183, 1
          %s864 = smul.addr %s863, 2
          %s865 = scalar_lea.vmem [#allocation3], %s864
          %866 = dma.done %s862, 32
        $region60: #{tpu_custom_call.1} parent=55 // pred_fallthru
          _
      $region56: #{tpu_custom_call.1} parent=5 // pred_fallthru
        _
    $region6: #{tpu_custom_call.1} parent=1 // loop_footer
      %s21 = sadd.s32 1, %s17
    $region7: #{tpu_custom_call.1} parent=1 // loop_footer_branch
      %16 = sbr.rel target = $region3
    $region8: #{tpu_custom_call.1} parent=1 // loop_exit
      _
    %867 = vsyncpa [#allocation4], 1
    %s868 = scalar_lea.sflag [#allocation4], 1
    %869 = vsyncpa %s868, 1

</llo_original>
